<compile_context>
chip_gen: v5e
topology: v5e:2x2
jax: 0.10.0
libtpu: 0.0.40
codegen_flags: <defaults>
</compile_context>

<pallas_src>
import numpy as np
import jax
import jax.numpy as jnp
from jax.experimental import pallas as pl
from jax.experimental.pallas import tpu as pltpu

SIZES = (5, 9, 13)   # SPPBlock default


def _vmem_capacity_bytes():
    try:
        return int(pltpu.get_tpu_info().vmem_capacity_bytes)
    except Exception:
        return 64 * 1024 * 1024          # conservative (v7x-sized) fallback


_VMEM_CAP = _vmem_capacity_bytes()


def _pick_fold(C, HW, itemsize, budget):
    """Fold g channels into the flat axis so L = g*H*W is lane-dense."""
    best_g, best_waste = 1, ((-HW) % 128) / HW
    for g in range(2, min(C, 8) + 1):
        if C % g:
            continue
        L = g * HW
        # Keep even the smallest channel tile of the folded layout feasible.
        if 16 * min(8, C // g) * L * itemsize > budget:
            continue
        waste = ((-L) % 128) / L
        if waste < best_waste - 1e-9:
            best_g, best_waste = g, waste
    return best_g


def _pick_channel_tile(C_f, L, itemsize, n_batch, budget):
    """Largest channel tile (multiple of 8, or C_f itself) that fits the VMEM
    budget while keeping >= 4 grid steps for megacore sharding + DMA overlap."""
    cands = sorted({d for d in range(8, C_f + 1, 8) if C_f % d == 0} | {C_f})
    # Footprint model: 2x double-buffered input + 2x(4-slice) output + ~6 live
    # temporaries ~= 16 tile-sized arrays.
    fits = [tc for tc in cands if 16 * tc * L * itemsize <= budget]
    if not fits:
        fits = [cands[0]]    # smallest valid tile (may exceed budget for huge C*HW)
    stepped = [tc for tc in fits if n_batch * (C_f // tc) >= 4]
    return max(stepped) if stepped else max(fits)


def _build_penalties(g, H, W, dtype):
    """(8, L) additive boundary penalties (0 in-row / -inf out-of-row) for the
    flat-axis offsets, row order: [w-2, w-1, w+1, w+2, h-2, h-1, h+1, h+2]."""
    L = g * H * W
    flat = np.arange(L)
    col = flat % W
    row = (flat // W) % H          # % H so channel folding stays exact
    rows = []
    for d in (-2, -1, 1, 2):
        rows.append(np.where((col + d >= 0) & (col + d < W), 0.0, -np.inf))
    for d in (-2, -1, 1, 2):
        rows.append(np.where((row + d >= 0) & (row + d < H), 0.0, -np.inf))
    return jnp.asarray(np.stack(rows), dtype=dtype)


def _make_spp_kernel(W, L):
    def kernel(pen_ref, x_ref, o_ref):
        pen = pen_ref[...]                               # (8, L)

        # (roll shift, penalty row) pairs.  W-axis offset d -> shift (-d) % L,
        # H-axis offset d -> shift (-d*W) % L.
        w5 = [(((-d) % L), i) for i, d in enumerate((-2, -1, 1, 2))]
        h5 = [(((-d * W) % L), 4 + i) for i, d in enumerate((-2, -1, 1, 2))]
        w3 = [w5[0], w5[3]]                              # dilation-2 taps (+-2)
        h3 = [h5[0], h5[3]]

        def taps(v, offs):
            # One separable pass: max of v with rolled + (0/-inf)-penalized copies.
            r = v
            for shift, idx in offs:
                r = jnp.maximum(r, pltpu.roll(v, shift, axis=1) + pen[idx:idx + 1])
            return r

        def pool5(v):            # exact 5x5 / stride-1 / pad-2 max pool
            return taps(taps(v, w5), h5)

        def pool3_dil2(v):       # dilation-2 3x3 max: exact 9x9 / 13x13 step
            return taps(taps(v, w3), h3)

        x = x_ref[0]                                     # (TC, L)
        o_ref[0, 3] = x                                  # identity (write-through)
        m5 = pool5(x)
        o_ref[0, 2] = m5                                 # k = 5
        m9 = pool3_dil2(m5)
        o_ref[0, 1] = m9                                 # k = 9
        o_ref[0, 0] = pool3_dil2(m9)                     # k = 13

    return kernel


@jax.jit
def spp_block(x):
    """SPPBlock forward.  x: (N, C, H, W) float -> (N, 4*C, H, W)."""
    # TODO(synk): -inf penalties assume a floating dtype (f32/bf16 as used in
    # the original network); integer inputs are not supported.
    N, C, H, W = x.shape
    HW = H * W
    budget = max(_VMEM_CAP // 4, 8 * 1024 * 1024)

    g = _pick_fold(C, HW, x.dtype.itemsize, budget)
    C_f, L = C // g, g * HW
    xf = x.reshape(N, C_f, L)                            # free reshape (contiguous)
    TC = _pick_channel_tile(C_f, L, x.dtype.itemsize, N, budget)
    pen = _build_penalties(g, H, W, x.dtype)             # (8, L), tiny

    out = pl.pallas_call(
        _make_spp_kernel(W, L),
        out_shape=jax.ShapeDtypeStruct((N, 4, C_f, L), x.dtype),
        grid_spec=pltpu.PrefetchScalarGridSpec(
            num_scalar_prefetch=0,
            grid=(N, C_f // TC),
            in_specs=[
                pl.BlockSpec((8, L), lambda n, c: (0, 0)),         # penalties (constant)
                pl.BlockSpec((1, TC, L), lambda n, c: (n, c, 0)),  # input tile
            ],
            out_specs=pl.BlockSpec((1, 4, TC, L), lambda n, c: (n, 0, c, 0)),
        ),
        compiler_params=pltpu.CompilerParams(
            dimension_semantics=("parallel", "parallel"),
            vmem_limit_bytes=min(int(0.6 * _VMEM_CAP), 96 * 1024 * 1024),
        ),
    )(pen, xf)

    # (N, 4, C_f, g*HW) -> (N, 4*C, H, W): pure contiguous regrouping (free);
    # branch order is already [pool13, pool9, pool5, identity], matching the
    # PyTorch concat of maxpools[::-1] + x.
    return out.reshape(N, 4 * C, H, W)


def _reference_spp(x):
    """Pure-JAX reference using lax.reduce_window (matches nn.MaxPool2d)."""
    outs = []
    for k in SIZES[::-1]:
        p = k // 2
        outs.append(
            jax.lax.reduce_window(
                x, -jnp.inf, jax.lax.max,
                window_dimensions=(1, 1, k, k),
                window_strides=(1, 1, 1, 1),
                padding=((0, 0), (0, 0), (p, p), (p, p)),
            )
        )
    outs.append(x)
    return jnp.concatenate(outs, axis=1)


if __name__ == "__main__":
    key = jax.random.PRNGKey(0)
    N, C, H, W = 2, 4, 16, 16
    x = jax.random.normal(key, (N, C, H, W), dtype=jnp.float32)

    out = spp_block(x)
    jax.block_until_ready(out)

    assert out.shape == (N, 4 * C, H, W), out.shape
    ref = _reference_spp(x)
    assert jnp.allclose(out, ref, atol=1e-6, rtol=1e-6), "mismatch vs reference"

    print("KERNEL_OK")
</pallas_src>

<mosaic_0001>
module attributes {stable_mosaic.version = 11 : i64} {
  func.func @kernel(%arg0: i32, %arg1: i32, %arg2: memref<8x256xf32, #tpu.memory_space<vmem>>, %arg3: memref<1x4x256xf32, #tpu.memory_space<vmem>>, %arg4: memref<1x4x4x256xf32, #tpu.memory_space<vmem>>) attributes {dimension_semantics = [#tpu.dimension_semantics<parallel>, #tpu.dimension_semantics<parallel>], iteration_bounds = array<i64: 2, 1>, scalar_prefetch = 0 : i64, scratch_operands = 0 : i64, tpu.core_type = #tpu.core_type<tc>, window_params = [{pipeline_mode = #tpu.pipeline_mode<synchronous>, transform_indices = @transform_0, window_bounds = array<i64: 8, 256>}, {transform_indices = @transform_1, window_bounds = array<i64: 1, 4, 256>}, {transform_indices = @transform_2, window_bounds = array<i64: 1, 4, 4, 256>}]} {
    %c0 = arith.constant 0 : index
    %c0_0 = arith.constant 0 : index
    %0 = vector.load %arg2[%c0, %c0_0] : memref<8x256xf32, #tpu.memory_space<vmem>>, vector<8x256xf32>
    %c0_1 = arith.constant 0 : index
    %c0_2 = arith.constant 0 : index
    %c0_3 = arith.constant 0 : index
    %1 = vector.load %arg3[%c0_1, %c0_2, %c0_3] : memref<1x4x256xf32, #tpu.memory_space<vmem>>, vector<1x4x256xf32>
    %2 = vector.shape_cast %1 : vector<1x4x256xf32> to vector<4x256xf32>
    %c0_4 = arith.constant 0 : index
    %c3 = arith.constant 3 : index
    %c0_5 = arith.constant 0 : index
    %c0_6 = arith.constant 0 : index
    %3 = vector.load %arg4[%c0_4, %c3, %c0_5, %c0_6] : memref<1x4x4x256xf32, #tpu.memory_space<vmem>>, vector<1x1x4x256xf32>
    %4 = vector.shape_cast %3 : vector<1x1x4x256xf32> to vector<4x256xf32>
    %5 = vector.shape_cast %2 : vector<4x256xf32> to vector<1x1x4x256xf32>
    tpu.vector_store %arg4[%c0_4, %c3, %c0_5, %c0_6], %5 {strides = array<i32>} : memref<1x4x4x256xf32, #tpu.memory_space<vmem>>, vector<1x1x4x256xf32>,
    %c2_i32 = arith.constant 2 : i32
    %6 = tpu.dynamic_rotate %2 by %c2_i32 dim 1 : vector<4x256xf32>, i32 -> vector<4x256xf32>
    %7 = vector.extract_strided_slice %0 {offsets = [0, 0], sizes = [1, 256], strides = [1, 1]} : vector<8x256xf32> to vector<1x256xf32>
    %8 = vector.broadcast %7 : vector<1x256xf32> to vector<4x256xf32>
    %9 = arith.addf %6, %8 : vector<4x256xf32>
    %10 = arith.maximumf %2, %9 : vector<4x256xf32>
    %c1_i32 = arith.constant 1 : i32
    %11 = tpu.dynamic_rotate %2 by %c1_i32 dim 1 : vector<4x256xf32>, i32 -> vector<4x256xf32>
    %12 = vector.extract_strided_slice %0 {offsets = [1, 0], sizes = [1, 256], strides = [1, 1]} : vector<8x256xf32> to vector<1x256xf32>
    %13 = vector.broadcast %12 : vector<1x256xf32> to vector<4x256xf32>
    %14 = arith.addf %11, %13 : vector<4x256xf32>
    %15 = arith.maximumf %10, %14 : vector<4x256xf32>
    %c255_i32 = arith.constant 255 : i32
    %16 = tpu.dynamic_rotate %2 by %c255_i32 dim 1 : vector<4x256xf32>, i32 -> vector<4x256xf32>
    %17 = vector.extract_strided_slice %0 {offsets = [2, 0], sizes = [1, 256], strides = [1, 1]} : vector<8x256xf32> to vector<1x256xf32>
    %18 = vector.broadcast %17 : vector<1x256xf32> to vector<4x256xf32>
    %19 = arith.addf %16, %18 : vector<4x256xf32>
    %20 = arith.maximumf %15, %19 : vector<4x256xf32>
    %c254_i32 = arith.constant 254 : i32
    %21 = tpu.dynamic_rotate %2 by %c254_i32 dim 1 : vector<4x256xf32>, i32 -> vector<4x256xf32>
    %22 = vector.extract_strided_slice %0 {offsets = [3, 0], sizes = [1, 256], strides = [1, 1]} : vector<8x256xf32> to vector<1x256xf32>
    %23 = vector.broadcast %22 : vector<1x256xf32> to vector<4x256xf32>
    %24 = arith.addf %21, %23 : vector<4x256xf32>
    %25 = arith.maximumf %20, %24 : vector<4x256xf32>
    %c32_i32 = arith.constant 32 : i32
    %26 = tpu.dynamic_rotate %25 by %c32_i32 dim 1 : vector<4x256xf32>, i32 -> vector<4x256xf32>
    %27 = vector.extract_strided_slice %0 {offsets = [4, 0], sizes = [1, 256], strides = [1, 1]} : vector<8x256xf32> to vector<1x256xf32>
    %28 = vector.broadcast %27 : vector<1x256xf32> to vector<4x256xf32>
    %29 = arith.addf %26, %28 : vector<4x256xf32>
    %30 = arith.maximumf %25, %29 : vector<4x256xf32>
    %c16_i32 = arith.constant 16 : i32
    %31 = tpu.dynamic_rotate %25 by %c16_i32 dim 1 : vector<4x256xf32>, i32 -> vector<4x256xf32>
    %32 = vector.extract_strided_slice %0 {offsets = [5, 0], sizes = [1, 256], strides = [1, 1]} : vector<8x256xf32> to vector<1x256xf32>
    %33 = vector.broadcast %32 : vector<1x256xf32> to vector<4x256xf32>
    %34 = arith.addf %31, %33 : vector<4x256xf32>
    %35 = arith.maximumf %30, %34 : vector<4x256xf32>
    %c240_i32 = arith.constant 240 : i32
    %36 = tpu.dynamic_rotate %25 by %c240_i32 dim 1 : vector<4x256xf32>, i32 -> vector<4x256xf32>
    %37 = vector.extract_strided_slice %0 {offsets = [6, 0], sizes = [1, 256], strides = [1, 1]} : vector<8x256xf32> to vector<1x256xf32>
    %38 = vector.broadcast %37 : vector<1x256xf32> to vector<4x256xf32>
    %39 = arith.addf %36, %38 : vector<4x256xf32>
    %40 = arith.maximumf %35, %39 : vector<4x256xf32>
    %c224_i32 = arith.constant 224 : i32
    %41 = tpu.dynamic_rotate %25 by %c224_i32 dim 1 : vector<4x256xf32>, i32 -> vector<4x256xf32>
    %42 = vector.extract_strided_slice %0 {offsets = [7, 0], sizes = [1, 256], strides = [1, 1]} : vector<8x256xf32> to vector<1x256xf32>
    %43 = vector.broadcast %42 : vector<1x256xf32> to vector<4x256xf32>
    %44 = arith.addf %41, %43 : vector<4x256xf32>
    %45 = arith.maximumf %40, %44 : vector<4x256xf32>
    %c0_7 = arith.constant 0 : index
    %c2 = arith.constant 2 : index
    %c0_8 = arith.constant 0 : index
    %c0_9 = arith.constant 0 : index
    %46 = vector.load %arg4[%c0_7, %c2, %c0_8, %c0_9] : memref<1x4x4x256xf32, #tpu.memory_space<vmem>>, vector<1x1x4x256xf32>
    %47 = vector.shape_cast %46 : vector<1x1x4x256xf32> to vector<4x256xf32>
    %48 = vector.shape_cast %45 : vector<4x256xf32> to vector<1x1x4x256xf32>
    tpu.vector_store %arg4[%c0_7, %c2, %c0_8, %c0_9], %48 {strides = array<i32>} : memref<1x4x4x256xf32, #tpu.memory_space<vmem>>, vector<1x1x4x256xf32>,
    %c2_i32_10 = arith.constant 2 : i32
    %49 = tpu.dynamic_rotate %45 by %c2_i32_10 dim 1 : vector<4x256xf32>, i32 -> vector<4x256xf32>
    %50 = vector.extract_strided_slice %0 {offsets = [0, 0], sizes = [1, 256], strides = [1, 1]} : vector<8x256xf32> to vector<1x256xf32>
    %51 = vector.broadcast %50 : vector<1x256xf32> to vector<4x256xf32>
    %52 = arith.addf %49, %51 : vector<4x256xf32>
    %53 = arith.maximumf %45, %52 : vector<4x256xf32>
    %c254_i32_11 = arith.constant 254 : i32
    %54 = tpu.dynamic_rotate %45 by %c254_i32_11 dim 1 : vector<4x256xf32>, i32 -> vector<4x256xf32>
    %55 = vector.extract_strided_slice %0 {offsets = [3, 0], sizes = [1, 256], strides = [1, 1]} : vector<8x256xf32> to vector<1x256xf32>
    %56 = vector.broadcast %55 : vector<1x256xf32> to vector<4x256xf32>
    %57 = arith.addf %54, %56 : vector<4x256xf32>
    %58 = arith.maximumf %53, %57 : vector<4x256xf32>
    %c32_i32_12 = arith.constant 32 : i32
    %59 = tpu.dynamic_rotate %58 by %c32_i32_12 dim 1 : vector<4x256xf32>, i32 -> vector<4x256xf32>
    %60 = vector.extract_strided_slice %0 {offsets = [4, 0], sizes = [1, 256], strides = [1, 1]} : vector<8x256xf32> to vector<1x256xf32>
    %61 = vector.broadcast %60 : vector<1x256xf32> to vector<4x256xf32>
    %62 = arith.addf %59, %61 : vector<4x256xf32>
    %63 = arith.maximumf %58, %62 : vector<4x256xf32>
    %c224_i32_13 = arith.constant 224 : i32
    %64 = tpu.dynamic_rotate %58 by %c224_i32_13 dim 1 : vector<4x256xf32>, i32 -> vector<4x256xf32>
    %65 = vector.extract_strided_slice %0 {offsets = [7, 0], sizes = [1, 256], strides = [1, 1]} : vector<8x256xf32> to vector<1x256xf32>
    %66 = vector.broadcast %65 : vector<1x256xf32> to vector<4x256xf32>
    %67 = arith.addf %64, %66 : vector<4x256xf32>
    %68 = arith.maximumf %63, %67 : vector<4x256xf32>
    %c0_14 = arith.constant 0 : index
    %c1 = arith.constant 1 : index
    %c0_15 = arith.constant 0 : index
    %c0_16 = arith.constant 0 : index
    %69 = vector.load %arg4[%c0_14, %c1, %c0_15, %c0_16] : memref<1x4x4x256xf32, #tpu.memory_space<vmem>>, vector<1x1x4x256xf32>
    %70 = vector.shape_cast %69 : vector<1x1x4x256xf32> to vector<4x256xf32>
    %71 = vector.shape_cast %68 : vector<4x256xf32> to vector<1x1x4x256xf32>
    tpu.vector_store %arg4[%c0_14, %c1, %c0_15, %c0_16], %71 {strides = array<i32>} : memref<1x4x4x256xf32, #tpu.memory_space<vmem>>, vector<1x1x4x256xf32>,
    %c2_i32_17 = arith.constant 2 : i32
    %72 = tpu.dynamic_rotate %68 by %c2_i32_17 dim 1 : vector<4x256xf32>, i32 -> vector<4x256xf32>
    %73 = vector.extract_strided_slice %0 {offsets = [0, 0], sizes = [1, 256], strides = [1, 1]} : vector<8x256xf32> to vector<1x256xf32>
    %74 = vector.broadcast %73 : vector<1x256xf32> to vector<4x256xf32>
    %75 = arith.addf %72, %74 : vector<4x256xf32>
    %76 = arith.maximumf %68, %75 : vector<4x256xf32>
    %c254_i32_18 = arith.constant 254 : i32
    %77 = tpu.dynamic_rotate %68 by %c254_i32_18 dim 1 : vector<4x256xf32>, i32 -> vector<4x256xf32>
    %78 = vector.extract_strided_slice %0 {offsets = [3, 0], sizes = [1, 256], strides = [1, 1]} : vector<8x256xf32> to vector<1x256xf32>
    %79 = vector.broadcast %78 : vector<1x256xf32> to vector<4x256xf32>
    %80 = arith.addf %77, %79 : vector<4x256xf32>
    %81 = arith.maximumf %76, %80 : vector<4x256xf32>
    %c32_i32_19 = arith.constant 32 : i32
    %82 = tpu.dynamic_rotate %81 by %c32_i32_19 dim 1 : vector<4x256xf32>, i32 -> vector<4x256xf32>
    %83 = vector.extract_strided_slice %0 {offsets = [4, 0], sizes = [1, 256], strides = [1, 1]} : vector<8x256xf32> to vector<1x256xf32>
    %84 = vector.broadcast %83 : vector<1x256xf32> to vector<4x256xf32>
    %85 = arith.addf %82, %84 : vector<4x256xf32>
    %86 = arith.maximumf %81, %85 : vector<4x256xf32>
    %c224_i32_20 = arith.constant 224 : i32
    %87 = tpu.dynamic_rotate %81 by %c224_i32_20 dim 1 : vector<4x256xf32>, i32 -> vector<4x256xf32>
    %88 = vector.extract_strided_slice %0 {offsets = [7, 0], sizes = [1, 256], strides = [1, 1]} : vector<8x256xf32> to vector<1x256xf32>
    %89 = vector.broadcast %88 : vector<1x256xf32> to vector<4x256xf32>
    %90 = arith.addf %87, %89 : vector<4x256xf32>
    %91 = arith.maximumf %86, %90 : vector<4x256xf32>
    %c0_21 = arith.constant 0 : index
    %c0_22 = arith.constant 0 : index
    %c0_23 = arith.constant 0 : index
    %c0_24 = arith.constant 0 : index
    %92 = vector.load %arg4[%c0_21, %c0_22, %c0_23, %c0_24] : memref<1x4x4x256xf32, #tpu.memory_space<vmem>>, vector<1x1x4x256xf32>
    %93 = vector.shape_cast %92 : vector<1x1x4x256xf32> to vector<4x256xf32>
    %94 = vector.shape_cast %91 : vector<4x256xf32> to vector<1x1x4x256xf32>
    tpu.vector_store %arg4[%c0_21, %c0_22, %c0_23, %c0_24], %94 {strides = array<i32>} : memref<1x4x4x256xf32, #tpu.memory_space<vmem>>, vector<1x1x4x256xf32>,
    return
  }
  func.func @transform_0(%arg0: i32, %arg1: i32) -> (i32, i32) {
    %c0_i32 = arith.constant 0 : i32
    %c0_i32_0 = arith.constant 0 : i32
    %c0_i32_1 = arith.constant 0 : i32
    return %c0_i32, %c0_i32_0 : i32, i32
  }
  func.func @transform_1(%arg0: i32, %arg1: i32) -> (i32, i32, i32) {
    %c0_i32 = arith.constant 0 : i32
    %c0_i32_0 = arith.constant 0 : i32
    return %arg0, %arg1, %c0_i32 : i32, i32, i32
  }
  func.func @transform_2(%arg0: i32, %arg1: i32) -> (i32, i32, i32, i32) {
    %c0_i32 = arith.constant 0 : i32
    %c0_i32_0 = arith.constant 0 : i32
    %c0_i32_1 = arith.constant 0 : i32
    return %arg0, %c0_i32, %arg1, %c0_i32_0 : i32, i32, i32, i32
  }
}

</mosaic_0001>

<llo_original>
// kernel: spp_block.1
$region0: #{spp_block.1}
  #allocation0 [shape = 'u32[]', space=smem, size = 0x4, offset = 0x4, fixed_abs, tag = 'smem constant byte address 0x4 - core index']
  #allocation1 [shape = 'u32[72,128]{1,0:T(1,128)}', space=vmem, size = 0x9000, scoped, tag = 'internal scratch']
  %s0 = inlined_call_operand.vmem [shape: f32[8,256], index: 0, kind: input, shape index: {}]
  %s1 = inlined_call_operand.vmem [shape: f32[2,4,256], index: 1, kind: input, shape index: {}]
  %s2 = inlined_call_operand.vmem [shape: f32[2,4,4,256], index: 2, kind: output, shape index: {}]
  %s3 = sld [smem:[#allocation0]]
  $region41: #{spp_block.1} parent=0
    _
  %s5 = ssub.s32 1, %s3
  %s6 = scalar_select 0, %s5, %s3
  loop: start=0, step=1, limit=4
  $region2: #{spp_block.1} parent=0 // loop_pre_header
    _
  $region3: #{spp_block.1} parent=0 // loop_header
    %s8 = sphi 0, %s12
    %p9 = scmp.ge.s32.totalorder %s8, 4
    %s15 = sphi 0, %s27
    %s16 = sphi 0, %s23
    %s17 = sphi 0, %s15
    %s18 = sphi 0, %s16
    %s19 = sphi 0, %s17
    %s20 = sphi 0, %s18
    %s28 = sphi 0, %s28
    %s30 = sphi 0, %s28
    %s31 = sphi 0, %s30
    %s45 = sphi 0, %s31
    %s53 = sphi 0, %s55
    %s56 = sphi 0, %s53
    %s57 = sphi 0, %s56
    %s73 = sphi 0, %s57
    %s81 = sphi 0, %s83
    %s84 = sphi 0, %s81
    %s85 = sphi 0, %s84
    %s101 = sphi 0, %s85
  $region4: #{spp_block.1} parent=0 // loop_header_branch
    %11 = sbr.rel (%p9) target = $region8
  $region5: #{spp_block.1} parent=0 // loop_body
    %s13 = ssub.s32 %s8, 1
    %s14 = ssub.s32 %s8, 2
    %s21 = sadd.s32 1, %s16
    %p22 = scmp.ge.s32.totalorder %s21, 1
    %s23 = scalar_select %p22, 0, %s21
    %s24 = sadd.s32 1, %s15
    %s25 = scalar_select %p22, %s24, %s15
    %p26 = scmp.ge.s32.totalorder %s25, 2
    %s27 = scalar_select %p26, 0, %s25
    %s29 = sadd.s32 %s28, 1
    %p32 = scmp.eq.s32.totalorder %s8, 1
    %p33 = scmp.ne.s32.totalorder %s28, %s30
    %p34 = scmp.eq.s32.totalorder %s8, 0
    %p35 = por %p33, %p34
    %p36 = scmp.ne.s32.totalorder %s28, %s30
    %p37 = scmp.eq.s32.totalorder %s13, 1
    %p38 = por %p36, %p37
    %p39 = scmp.ne.s32.totalorder %s30, %s31
    %p40 = scmp.eq.s32.totalorder %s13, 0
    %p41 = por %p39, %p40
    %p42 = scmp.ne.s32.totalorder %s30, %s31
    %p43 = scmp.eq.s32.totalorder %s14, 1
    %p44 = por %p42, %p43
    %p46 = scmp.ne.s32.totalorder %s31, %s45
    %p47 = scmp.eq.s32.totalorder %s14, 0
    %p48 = por %p46, %p47
    %s49 = ssub.s32 %s15, %s27
    %s50 = ssub.s32 %s16, %s23
    %s51 = sor.u32 %s49, %s50
    %p52 = scmp.eq.s32.totalorder %s51, 0
    %s54 = sadd.s32 %s53, 1
    %s55 = scalar_select %p52, %s53, %s54
    %p58 = pneg %p52
    %p59 = scmp.eq.s32.totalorder %s8, 1
    %p60 = por %p58, %p59
    %p61 = scmp.ne.s32.totalorder %s53, %s56
    %p62 = scmp.eq.s32.totalorder %s8, 0
    %p63 = por %p61, %p62
    %p64 = scmp.ne.s32.totalorder %s53, %s56
    %p65 = scmp.eq.s32.totalorder %s13, 1
    %p66 = por %p64, %p65
    %p67 = scmp.ne.s32.totalorder %s56, %s57
    %p68 = scmp.eq.s32.totalorder %s13, 0
    %p69 = por %p67, %p68
    %p70 = scmp.ne.s32.totalorder %s56, %s57
    %p71 = scmp.eq.s32.totalorder %s14, 1
    %p72 = por %p70, %p71
    %p74 = scmp.ne.s32.totalorder %s57, %s73
    %p75 = scmp.eq.s32.totalorder %s14, 0
    %p76 = por %p74, %p75
    %s77 = ssub.s32 %s15, %s27
    %s78 = ssub.s32 %s16, %s23
    %s79 = sor.u32 %s77, %s78
    %p80 = scmp.eq.s32.totalorder %s79, 0
    %s82 = sadd.s32 %s81, 1
    %s83 = scalar_select %p80, %s81, %s82
    %p86 = pneg %p80
    %p87 = scmp.eq.s32.totalorder %s8, 1
    %p88 = por %p86, %p87
    %p89 = scmp.ne.s32.totalorder %s81, %s84
    %p90 = scmp.eq.s32.totalorder %s8, 0
    %p91 = por %p89, %p90
    %p92 = scmp.ne.s32.totalorder %s81, %s84
    %p93 = scmp.eq.s32.totalorder %s13, 1
    %p94 = por %p92, %p93
    %p95 = scmp.ne.s32.totalorder %s84, %s85
    %p96 = scmp.eq.s32.totalorder %s13, 0
    %p97 = por %p95, %p96
    %p98 = scmp.ne.s32.totalorder %s84, %s85
    %p99 = scmp.eq.s32.totalorder %s14, 1
    %p100 = por %p98, %p99
    %p102 = scmp.ne.s32.totalorder %s85, %s101
    %p103 = scmp.eq.s32.totalorder %s14, 0
    %p104 = por %p102, %p103
    %p105 = scmp.le.s32.totalorder 1, %s8
    %p106 = scmp.lt.s32.totalorder %s8, 3
    %p107 = pnand %p105, %p106
    %p108 = pneg %p107
    // Predicated region
    $region9: #{spp_block.1} parent=5 // pred_check
      _
    $region10: #{spp_block.1} parent=5 // pred_check_branch
      %110 = sbr.rel (%p107) target = $region12
    $region11: #{spp_block.1} parent=5 // pred_region
      %s111 = ssub.s32 %s8, 1
      // Predicated region
      $region13: #{spp_block.1} parent=11 // pred_check
        %p112 = pneg %p41
      $region14: #{spp_block.1} parent=11 // pred_check_branch
        %114 = sbr.rel (%p112) target = $region16
      $region15: #{spp_block.1} parent=11 // pred_region
        _
      $region16: #{spp_block.1} parent=11 // pred_fallthru
        _
    $region12: #{spp_block.1} parent=5 // pred_fallthru
      _
    %p115 = scmp.lt.s32.totalorder %s8, 2
    // Predicated region
    $region17: #{spp_block.1} parent=5 // pred_check
      %p116 = pneg %p115
    $region18: #{spp_block.1} parent=5 // pred_check_branch
      %118 = sbr.rel (%p116) target = $region20
    $region19: #{spp_block.1} parent=5 // pred_region
      // Predicated region
      $region21: #{spp_block.1} parent=19 // pred_check
        %p119 = pneg %p63
      $region22: #{spp_block.1} parent=19 // pred_check_branch
        %121 = sbr.rel (%p119) target = $region24
      $region23: #{spp_block.1} parent=19 // pred_region
        %p122 = scmp.lt.s32.totalorder %s15, 1
        %s123 = scalar_select %p122, %s15, 1
        %p124 = scmp.lt.s32.totalorder %s16, 0
        %s125 = scalar_select %p124, %s16, 0
        %s126 = smul.addr %s125, 2
        %s127 = smul.addr %s123, 2
        %s128 = sadd.s32 %s126, %s127
        %s129 = smul.addr %s128, 4
        %s130 = scalar_lea.vmem %s1, %s129
      $region24: #{spp_block.1} parent=19 // pred_fallthru
        _
    $region20: #{spp_block.1} parent=5 // pred_fallthru
      _
    %p131 = scmp.le.s32.totalorder 1, %s8
    %p132 = scmp.lt.s32.totalorder %s8, 3
    %p133 = pnand %p131, %p132
    %p134 = pneg %p133
    // Predicated region
    $region25: #{spp_block.1} parent=5 // pred_check
      _
    $region26: #{spp_block.1} parent=5 // pred_check_branch
      %136 = sbr.rel (%p133) target = $region28
    $region27: #{spp_block.1} parent=5 // pred_region
      %s137 = ssub.s32 %s8, 1
      %p138 = pneg %p41
      %p139 = pneg %p38
      %p140 = scmp.lt.s32.totalorder %s17, 1
      %s141 = scalar_select %p140, %s17, 1
      %p142 = scmp.lt.s32.totalorder %s18, 0
      %s143 = scalar_select %p142, %s18, 0
      %s144 = smul.addr %s143, 2
      %s145 = smul.addr %s141, 2
      %s146 = sadd.s32 %s144, %s145
      %s147 = smul.addr %s146, 4
      %s148 = scalar_lea.vmem %s1, %s147
      %p149 = pneg %p69
      %p150 = pneg %p66
      %p151 = pneg %p97
      %p152 = pneg %p94
      %p153 = scmp.lt.s32.totalorder %s17, 1
      %s154 = scalar_select %p153, %s17, 1
      %p155 = scmp.lt.s32.totalorder %s18, 0
      %s156 = scalar_select %p155, %s18, 0
      %s157 = smul.addr %s156, 2
      %s158 = smul.addr %s154, 8
      %s159 = sadd.s32 %s157, %s158
      %s160 = smul.addr %s159, 4
      %s161 = scalar_lea.vmem %s2, %s160
      %p162 = scmp.lt.s32.totalorder %s17, 1
      %s163 = scalar_select %p162, %s17, 1
      %p164 = scmp.lt.s32.totalorder %s18, 0
      %s165 = scalar_select %p164, %s18, 0
      %s166 = smul.addr %s165, 2
      %s167 = smul.addr %s163, 2
      %s168 = sadd.s32 %s166, %s167
      %s169 = smul.addr %s168, 4
      %s170 = scalar_lea.vmem %s1, %s169
      %p171 = scmp.lt.s32.totalorder %s17, 1
      %s172 = scalar_select %p171, %s17, 1
      %p173 = scmp.lt.s32.totalorder %s18, 0
      %s174 = scalar_select %p173, %s18, 0
      %s175 = smul.addr %s174, 2
      %s176 = smul.addr %s172, 8
      %s177 = sadd.s32 %s175, %s176
      %s178 = smul.addr %s177, 4
      %s179 = scalar_lea.vmem %s2, %s178
      %v180 = vld [vmem:[%s0] sm:$0xff]
      %v181 = vld [vmem:[%s0 + $0x8] sm:$0xff]
      %v182 = vld [vmem:[%s170] sm:$0xff]
      %s183 = scalar_lea.vmem %s179, 24
      %184 = vst [vmem:[%s183] sm:$0xff] %v182
      %186 = vst [vmem:[#allocation1] ss:$2 sm:$0xff] %v182
      %v187 = vld.sshfl [vmem:[#allocation1] sm:$0xff pattern:$0x75316420]
      %v188 = vld.sshfl [vmem:[#allocation1 + $0x8] sm:$0xff pattern:$0x75316420]
      %191 = vrot.lane.b32.xlu0 %v187, 2
      %v192 = vpop.permute.xlu0 %191
      %193 = vrot.lane.b32.xlu0 %v188, 2
      %v194 = vpop.permute.xlu0 %193
      %v195 = vlaneseq
      %v196 = vand.u32 %v195, 127
      %vm197 = vcmp.lt.s32.totalorder %v196, 2
      %v198 = vsel %vm197, %v192, %v194
      %v199 = vsel %vm197, %v194, %v192
      %v200 = vperm.slane %v180, 0
      %v201 = vperm.slane %v181, 0
      %v202 = vadd.f32 %v199, %v200
      %v203 = vadd.f32 %v198, %v201
      %v206 = vrot.slane %v203, 4
      %vm207 = vcmask 1043456
      %v208 = vsel %vm207, %v202, %v206
      %v210 = vmax.f32 %v182, %v208
      %211 = vst [vmem:[#allocation1] ss:$2 sm:$0xff] %v182
      %v212 = vld.sshfl [vmem:[#allocation1] sm:$0xff pattern:$0x75316420]
      %v213 = vld.sshfl [vmem:[#allocation1 + $0x8] sm:$0xff pattern:$0x75316420]
      %216 = vrot.lane.b32.xlu0 %v212, 1
      %v217 = vpop.permute.xlu0 %216
      %218 = vrot.lane.b32.xlu0 %v213, 1
      %v219 = vpop.permute.xlu0 %218
      %vm220 = vcmp.lt.s32.totalorder %v196, 1
      %v221 = vsel %vm220, %v217, %v219
      %v222 = vsel %vm220, %v219, %v217
      %v223 = vperm.slane %v180, 1
      %v224 = vperm.slane %v181, 1
      %v225 = vadd.f32 %v222, %v223
      %v226 = vadd.f32 %v221, %v224
      %v229 = vrot.slane %v226, 4
      %v230 = vsel %vm207, %v225, %v229
      %v232 = vmax.f32 %v210, %v230
      %233 = vst [vmem:[#allocation1] ss:$2 sm:$0xff] %v182
      %v234 = vld.sshfl [vmem:[#allocation1] sm:$0xff pattern:$0x75316420]
      %v235 = vld.sshfl [vmem:[#allocation1 + $0x8] sm:$0xff pattern:$0x75316420]
      %238 = vrot.lane.b32.xlu0 %v234, 127
      %v239 = vpop.permute.xlu0 %238
      %240 = vrot.lane.b32.xlu0 %v235, 127
      %v241 = vpop.permute.xlu0 %240
      %vm242 = vcmp.lt.s32.totalorder %v196, 127
      %v243 = vsel %vm242, %v239, %v241
      %v244 = vsel %vm242, %v241, %v239
      %v245 = vperm.slane %v180, 2
      %v246 = vperm.slane %v181, 2
      %v247 = vadd.f32 %v243, %v245
      %v248 = vadd.f32 %v244, %v246
      %v251 = vrot.slane %v248, 4
      %v252 = vsel %vm207, %v247, %v251
      %v254 = vmax.f32 %v232, %v252
      %255 = vst [vmem:[#allocation1] ss:$2 sm:$0xff] %v182
      %v256 = vld.sshfl [vmem:[#allocation1] sm:$0xff pattern:$0x75316420]
      %v257 = vld.sshfl [vmem:[#allocation1 + $0x8] sm:$0xff pattern:$0x75316420]
      %260 = vrot.lane.b32.xlu0 %v256, 126
      %v261 = vpop.permute.xlu0 %260
      %262 = vrot.lane.b32.xlu0 %v257, 126
      %v263 = vpop.permute.xlu0 %262
      %vm264 = vcmp.lt.s32.totalorder %v196, 126
      %v265 = vsel %vm264, %v261, %v263
      %v266 = vsel %vm264, %v263, %v261
      %v267 = vperm.slane %v180, 3
      %v268 = vperm.slane %v181, 3
      %v269 = vadd.f32 %v265, %v267
      %v270 = vadd.f32 %v266, %v268
      %v273 = vrot.slane %v270, 4
      %v274 = vsel %vm207, %v269, %v273
      %v276 = vmax.f32 %v254, %v274
      %278 = vst [vmem:[#allocation1] ss:$2 sm:$0xff] %v276
      %v279 = vld.sshfl [vmem:[#allocation1] sm:$0xff pattern:$0x75316420]
      %v280 = vld.sshfl [vmem:[#allocation1 + $0x8] sm:$0xff pattern:$0x75316420]
      %283 = vrot.lane.b32.xlu0 %v279, 32
      %v284 = vpop.permute.xlu0 %283
      %285 = vrot.lane.b32.xlu0 %v280, 32
      %v286 = vpop.permute.xlu0 %285
      %vm287 = vcmp.lt.s32.totalorder %v196, 32
      %v288 = vsel %vm287, %v284, %v286
      %v289 = vsel %vm287, %v286, %v284
      %v290 = vperm.slane %v180, 4
      %v291 = vperm.slane %v181, 4
      %v292 = vadd.f32 %v289, %v290
      %v293 = vadd.f32 %v288, %v291
      %v296 = vrot.slane %v293, 4
      %v297 = vsel %vm207, %v292, %v296
      %v299 = vmax.f32 %v276, %v297
      %300 = vst [vmem:[#allocation1] ss:$2 sm:$0xff] %v276
      %v301 = vld.sshfl [vmem:[#allocation1] sm:$0xff pattern:$0x75316420]
      %v302 = vld.sshfl [vmem:[#allocation1 + $0x8] sm:$0xff pattern:$0x75316420]
      %305 = vrot.lane.b32.xlu0 %v301, 16
      %v306 = vpop.permute.xlu0 %305
      %307 = vrot.lane.b32.xlu0 %v302, 16
      %v308 = vpop.permute.xlu0 %307
      %vm309 = vcmp.lt.s32.totalorder %v196, 16
      %v310 = vsel %vm309, %v306, %v308
      %v311 = vsel %vm309, %v308, %v306
      %v312 = vperm.slane %v180, 5
      %v313 = vperm.slane %v181, 5
      %v314 = vadd.f32 %v311, %v312
      %v315 = vadd.f32 %v310, %v313
      %v318 = vrot.slane %v315, 4
      %v319 = vsel %vm207, %v314, %v318
      %v321 = vmax.f32 %v299, %v319
      %322 = vst [vmem:[#allocation1] ss:$2 sm:$0xff] %v276
      %v323 = vld.sshfl [vmem:[#allocation1] sm:$0xff pattern:$0x75316420]
      %v324 = vld.sshfl [vmem:[#allocation1 + $0x8] sm:$0xff pattern:$0x75316420]
      %327 = vrot.lane.b32.xlu0 %v323, 112
      %v328 = vpop.permute.xlu0 %327
      %329 = vrot.lane.b32.xlu0 %v324, 112
      %v330 = vpop.permute.xlu0 %329
      %vm331 = vcmp.lt.s32.totalorder %v196, 112
      %v332 = vsel %vm331, %v328, %v330
      %v333 = vsel %vm331, %v330, %v328
      %v334 = vperm.slane %v180, 6
      %v335 = vperm.slane %v181, 6
      %v336 = vadd.f32 %v332, %v334
      %v337 = vadd.f32 %v333, %v335
      %v340 = vrot.slane %v337, 4
      %v341 = vsel %vm207, %v336, %v340
      %v343 = vmax.f32 %v321, %v341
      %344 = vst [vmem:[#allocation1] ss:$2 sm:$0xff] %v276
      %v345 = vld.sshfl [vmem:[#allocation1] sm:$0xff pattern:$0x75316420]
      %v346 = vld.sshfl [vmem:[#allocation1 + $0x8] sm:$0xff pattern:$0x75316420]
      %349 = vrot.lane.b32.xlu0 %v345, 96
      %v350 = vpop.permute.xlu0 %349
      %351 = vrot.lane.b32.xlu0 %v346, 96
      %v352 = vpop.permute.xlu0 %351
      %vm353 = vcmp.lt.s32.totalorder %v196, 96
      %v354 = vsel %vm353, %v350, %v352
      %v355 = vsel %vm353, %v352, %v350
      %v356 = vperm.slane %v180, 7
      %v357 = vperm.slane %v181, 7
      %v358 = vadd.f32 %v354, %v356
      %v359 = vadd.f32 %v355, %v357
      %v362 = vrot.slane %v359, 4
      %v363 = vsel %vm207, %v358, %v362
      %v365 = vmax.f32 %v343, %v363
      %s366 = scalar_lea.vmem %s179, 16
      %367 = vst [vmem:[%s366] sm:$0xff] %v365
      %369 = vst [vmem:[#allocation1] ss:$2 sm:$0xff] %v365
      %v370 = vld.sshfl [vmem:[#allocation1] sm:$0xff pattern:$0x75316420]
      %v371 = vld.sshfl [vmem:[#allocation1 + $0x8] sm:$0xff pattern:$0x75316420]
      %374 = vrot.lane.b32.xlu0 %v370, 2
      %v375 = vpop.permute.xlu0 %374
      %376 = vrot.lane.b32.xlu0 %v371, 2
      %v377 = vpop.permute.xlu0 %376
      %v378 = vsel %vm197, %v375, %v377
      %v379 = vsel %vm197, %v377, %v375
      %v380 = vadd.f32 %v379, %v200
      %v381 = vadd.f32 %v378, %v201
      %v384 = vrot.slane %v381, 4
      %v385 = vsel %vm207, %v380, %v384
      %v387 = vmax.f32 %v365, %v385
      %388 = vst [vmem:[#allocation1] ss:$2 sm:$0xff] %v365
      %v389 = vld.sshfl [vmem:[#allocation1] sm:$0xff pattern:$0x75316420]
      %v390 = vld.sshfl [vmem:[#allocation1 + $0x8] sm:$0xff pattern:$0x75316420]
      %393 = vrot.lane.b32.xlu0 %v389, 126
      %v394 = vpop.permute.xlu0 %393
      %395 = vrot.lane.b32.xlu0 %v390, 126
      %v396 = vpop.permute.xlu0 %395
      %v397 = vsel %vm264, %v394, %v396
      %v398 = vsel %vm264, %v396, %v394
      %v399 = vadd.f32 %v397, %v267
      %v400 = vadd.f32 %v398, %v268
      %v403 = vrot.slane %v400, 4
      %v404 = vsel %vm207, %v399, %v403
      %v406 = vmax.f32 %v387, %v404
      %408 = vst [vmem:[#allocation1] ss:$2 sm:$0xff] %v406
      %v409 = vld.sshfl [vmem:[#allocation1] sm:$0xff pattern:$0x75316420]
      %v410 = vld.sshfl [vmem:[#allocation1 + $0x8] sm:$0xff pattern:$0x75316420]
      %413 = vrot.lane.b32.xlu0 %v409, 32
      %v414 = vpop.permute.xlu0 %413
      %415 = vrot.lane.b32.xlu0 %v410, 32
      %v416 = vpop.permute.xlu0 %415
      %v417 = vsel %vm287, %v414, %v416
      %v418 = vsel %vm287, %v416, %v414
      %v419 = vadd.f32 %v418, %v290
      %v420 = vadd.f32 %v417, %v291
      %v423 = vrot.slane %v420, 4
      %v424 = vsel %vm207, %v419, %v423
      %v426 = vmax.f32 %v406, %v424
      %427 = vst [vmem:[#allocation1] ss:$2 sm:$0xff] %v406
      %v428 = vld.sshfl [vmem:[#allocation1] sm:$0xff pattern:$0x75316420]
      %v429 = vld.sshfl [vmem:[#allocation1 + $0x8] sm:$0xff pattern:$0x75316420]
      %432 = vrot.lane.b32.xlu0 %v428, 96
      %v433 = vpop.permute.xlu0 %432
      %434 = vrot.lane.b32.xlu0 %v429, 96
      %v435 = vpop.permute.xlu0 %434
      %v436 = vsel %vm353, %v433, %v435
      %v437 = vsel %vm353, %v435, %v433
      %v438 = vadd.f32 %v436, %v356
      %v439 = vadd.f32 %v437, %v357
      %v442 = vrot.slane %v439, 4
      %v443 = vsel %vm207, %v438, %v442
      %v445 = vmax.f32 %v426, %v443
      %s446 = scalar_lea.vmem %s179, 8
      %447 = vst [vmem:[%s446] sm:$0xff] %v445
      %449 = vst [vmem:[#allocation1] ss:$2 sm:$0xff] %v445
      %v450 = vld.sshfl [vmem:[#allocation1] sm:$0xff pattern:$0x75316420]
      %v451 = vld.sshfl [vmem:[#allocation1 + $0x8] sm:$0xff pattern:$0x75316420]
      %454 = vrot.lane.b32.xlu0 %v450, 2
      %v455 = vpop.permute.xlu0 %454
      %456 = vrot.lane.b32.xlu0 %v451, 2
      %v457 = vpop.permute.xlu0 %456
      %v458 = vsel %vm197, %v455, %v457
      %v459 = vsel %vm197, %v457, %v455
      %v460 = vadd.f32 %v459, %v200
      %v461 = vadd.f32 %v458, %v201
      %v464 = vrot.slane %v461, 4
      %v465 = vsel %vm207, %v460, %v464
      %v467 = vmax.f32 %v445, %v465
      %468 = vst [vmem:[#allocation1] ss:$2 sm:$0xff] %v445
      %v469 = vld.sshfl [vmem:[#allocation1] sm:$0xff pattern:$0x75316420]
      %v470 = vld.sshfl [vmem:[#allocation1 + $0x8] sm:$0xff pattern:$0x75316420]
      %473 = vrot.lane.b32.xlu0 %v469, 126
      %v474 = vpop.permute.xlu0 %473
      %475 = vrot.lane.b32.xlu0 %v470, 126
      %v476 = vpop.permute.xlu0 %475
      %v477 = vsel %vm264, %v474, %v476
      %v478 = vsel %vm264, %v476, %v474
      %v479 = vadd.f32 %v477, %v267
      %v480 = vadd.f32 %v478, %v268
      %v483 = vrot.slane %v480, 4
      %v484 = vsel %vm207, %v479, %v483
      %v486 = vmax.f32 %v467, %v484
      %488 = vst [vmem:[#allocation1] ss:$2 sm:$0xff] %v486
      %v489 = vld.sshfl [vmem:[#allocation1] sm:$0xff pattern:$0x75316420]
      %v490 = vld.sshfl [vmem:[#allocation1 + $0x8] sm:$0xff pattern:$0x75316420]
      %493 = vrot.lane.b32.xlu0 %v489, 32
      %v494 = vpop.permute.xlu0 %493
      %495 = vrot.lane.b32.xlu0 %v490, 32
      %v496 = vpop.permute.xlu0 %495
      %v497 = vsel %vm287, %v494, %v496
      %v498 = vsel %vm287, %v496, %v494
      %v499 = vadd.f32 %v498, %v290
      %v500 = vadd.f32 %v497, %v291
      %v503 = vrot.slane %v500, 4
      %v504 = vsel %vm207, %v499, %v503
      %v506 = vmax.f32 %v486, %v504
      %507 = vst [vmem:[#allocation1] ss:$2 sm:$0xff] %v486
      %v508 = vld.sshfl [vmem:[#allocation1] sm:$0xff pattern:$0x75316420]
      %v509 = vld.sshfl [vmem:[#allocation1 + $0x8] sm:$0xff pattern:$0x75316420]
      %512 = vrot.lane.b32.xlu0 %v508, 96
      %v513 = vpop.permute.xlu0 %512
      %514 = vrot.lane.b32.xlu0 %v509, 96
      %v515 = vpop.permute.xlu0 %514
      %v516 = vsel %vm353, %v513, %v515
      %v517 = vsel %vm353, %v515, %v513
      %v518 = vadd.f32 %v516, %v356
      %v519 = vadd.f32 %v517, %v357
      %v522 = vrot.slane %v519, 4
      %v523 = vsel %vm207, %v518, %v522
      %v525 = vmax.f32 %v506, %v523
      %526 = vst [vmem:[%s179] sm:$0xff] %v525
      %p527 = scmp.lt.s32.totalorder %s17, 1
      %s528 = scalar_select %p527, %s17, 1
      %p529 = scmp.lt.s32.totalorder %s18, 0
      %s530 = scalar_select %p529, %s18, 0
      %s531 = smul.addr %s530, 2
      %s532 = smul.addr %s528, 8
      %s533 = sadd.s32 %s531, %s532
      %s534 = smul.addr %s533, 4
      %s535 = scalar_lea.vmem %s2, %s534
      // Predicated region
      $region29: #{spp_block.1} parent=27 // pred_check
        %p536 = pneg %p94
      $region30: #{spp_block.1} parent=27 // pred_check_branch
        %538 = sbr.rel (%p536) target = $region32
      $region31: #{spp_block.1} parent=27 // pred_region
        _
      $region32: #{spp_block.1} parent=27 // pred_fallthru
        _
    $region28: #{spp_block.1} parent=5 // pred_fallthru
      _
    %p539 = scmp.le.s32.totalorder 2, %s8
    // Predicated region
    $region33: #{spp_block.1} parent=5 // pred_check
      %p540 = pneg %p539
    $region34: #{spp_block.1} parent=5 // pred_check_branch
      %542 = sbr.rel (%p540) target = $region36
    $region35: #{spp_block.1} parent=5 // pred_region
      %s543 = ssub.s32 %s8, 2
      // Predicated region
      $region37: #{spp_block.1} parent=35 // pred_check
        %p544 = pneg %p100
      $region38: #{spp_block.1} parent=35 // pred_check_branch
        %546 = sbr.rel (%p544) target = $region40
      $region39: #{spp_block.1} parent=35 // pred_region
        %p547 = scmp.lt.s32.totalorder %s19, 1
        %s548 = scalar_select %p547, %s19, 1
        %p549 = scmp.lt.s32.totalorder %s20, 0
        %s550 = scalar_select %p549, %s20, 0
        %s551 = smul.addr %s550, 2
        %s552 = smul.addr %s548, 8
        %s553 = sadd.s32 %s551, %s552
        %s554 = smul.addr %s553, 4
        %s555 = scalar_lea.vmem %s2, %s554
      $region40: #{spp_block.1} parent=35 // pred_fallthru
        _
    $region36: #{spp_block.1} parent=5 // pred_fallthru
      _
  $region6: #{spp_block.1} parent=0 // loop_footer
    %s12 = sadd.s32 1, %s8
  $region7: #{spp_block.1} parent=0 // loop_footer_branch
    %7 = sbr.rel target = $region3
  $region8: #{spp_block.1} parent=0 // loop_exit
    _

</llo_original>
